<compile_context>
chip_gen: v7x
topology: tpu7x:2x2x1
jax: 0.10.0
libtpu: 0.0.40
codegen_flags: <defaults>
</compile_context>

<pallas_src>
import functools

import jax
import jax.numpy as jnp
from jax.experimental import pallas as pl
from jax.experimental.pallas import tpu as pltpu

_LANES = 128


def _mixed_loss_kernel(x_ref, y_ref, out_ref, acc_sq_ref, acc_ab_ref, *,
                       rows_total, need_mask):
    s = pl.program_id(1)
    steps = pl.num_programs(1)

    @pl.when(s == 0)
    def _():
        acc_sq_ref[...] = jnp.zeros_like(acc_sq_ref)
        acc_ab_ref[...] = jnp.zeros_like(acc_ab_ref)

    d = x_ref[...].astype(jnp.float32) - y_ref[...].astype(jnp.float32)

    if need_mask:
        # Zero d (not just the products) for rows past the end of the row-padded
        # input; covers the partial last block and any duplicated clamped block.
        c = pl.program_id(0)
        block_rows = x_ref.shape[0]
        row0 = (c * steps + s) * block_rows
        local = jax.lax.broadcasted_iota(jnp.int32, d.shape, 0)
        d = jnp.where(row0 + local < rows_total, d, 0.0)

    acc_sq_ref[...] += jnp.sum(d * d, axis=0, keepdims=True)       # MSE partial
    acc_ab_ref[...] += jnp.sum(jnp.abs(d), axis=0, keepdims=True)  # L1  partial

    @pl.when(s == steps - 1)
    def _():
        out_ref[...] = jnp.concatenate(
            [acc_sq_ref[...], acc_ab_ref[...]], axis=0)[None]


def mixed_loss(x, y, weight=0.3, block_rows=2048, num_splits=2):
    """w * MSE(x, y) + (1 - w) * L1(x, y), both mean-reduced over all elements."""
    assert x.shape == y.shape, (x.shape, y.shape)
    assert 0.0 < weight < 1.0, f"Weight must be between 0, 1, got {weight}"

    n = x.size
    xf = x.reshape(-1)
    yf = y.reshape(-1)

    # Pad only when needed (to a multiple of one (8,128) tile).  Padded entries
    # contribute 0 to both sums since x_pad == y_pad there.
    pad = (-n) % (8 * _LANES)
    if pad:
        xf = jnp.pad(xf, (0, pad))
        yf = jnp.pad(yf, (0, pad))

    rows_total = (n + pad) // _LANES           # multiple of 8
    x2 = xf.reshape(rows_total, _LANES)        # contiguous reshape: no copy
    y2 = yf.reshape(rows_total, _LANES)

    # Tile: as big as possible up to block_rows (multiple of 8 sublanes).
    block_rows = max(8, (min(block_rows, rows_total) // 8) * 8)
    blocks_total = pl.cdiv(rows_total, block_rows)

    # Split the row-blocks over a leading "parallel" axis so v7x's two
    # TensorCores each reduce half the rows (harmless on 1-TC chips).
    num_splits = max(1, min(num_splits, blocks_total))
    steps = pl.cdiv(blocks_total, num_splits)

    exact = (num_splits * steps == blocks_total)
    need_mask = (blocks_total * block_rows != rows_total) or (not exact)

    if exact:
        in_index_map = lambda c, s: (c * steps + s, 0)
    else:
        last_block = blocks_total - 1
        # Clamp so the DMA never targets a fully out-of-range block; the
        # duplicated block's contribution is zeroed by the in-kernel mask.
        in_index_map = lambda c, s: (jnp.minimum(c * steps + s, last_block), 0)

    kernel = functools.partial(
        _mixed_loss_kernel, rows_total=rows_total, need_mask=need_mask)

    partials = pl.pallas_call(
        kernel,
        out_shape=jax.ShapeDtypeStruct((num_splits, 2, _LANES), jnp.float32),
        grid_spec=pltpu.PrefetchScalarGridSpec(
            num_scalar_prefetch=0,
            grid=(num_splits, steps),
            in_specs=[
                pl.BlockSpec((block_rows, _LANES), in_index_map),
                pl.BlockSpec((block_rows, _LANES), in_index_map),
            ],
            out_specs=pl.BlockSpec((1, 2, _LANES), lambda c, s: (c, 0, 0)),
            scratch_shapes=[
                pltpu.VMEM((1, _LANES), jnp.float32),
                pltpu.VMEM((1, _LANES), jnp.float32),
            ],
        ),
        compiler_params=pltpu.CompilerParams(
            dimension_semantics=("parallel", "arbitrary"),
        ),
    )(x2, y2)

    # Tiny epilogue: collapse lane partials + per-core partials, then blend.
    sums = jnp.sum(partials, axis=(0, 2))      # [sum_sq, sum_abs]
    inv_n = 1.0 / float(n)
    mse = sums[0] * inv_n
    mae = sums[1] * inv_n
    return weight * mse + (1.0 - weight) * mae


if __name__ == "__main__":
    key = jax.random.PRNGKey(0)
    k1, k2 = jax.random.split(key)
    # NCHW inputs, small shapes.
    x = jax.random.normal(k1, (2, 4, 16, 16), dtype=jnp.float32)
    t = jax.random.normal(k2, (2, 4, 16, 16), dtype=jnp.float32)

    w = 0.3
    loss = mixed_loss(x, t, weight=w)
    loss = jax.block_until_ready(loss)

    # Pure-JAX reference check.
    ref = w * jnp.mean((x - t) ** 2) + (1.0 - w) * jnp.mean(jnp.abs(x - t))
    assert jnp.allclose(loss, ref, rtol=1e-5, atol=1e-5), (loss, ref)

    print("KERNEL_OK")
</pallas_src>

<mosaic_0001>
module attributes {stable_mosaic.version = 11 : i64} {
  func.func @_mixed_loss_kernel(%arg0: i32, %arg1: i32, %arg2: memref<16x128xf32, #tpu.memory_space<vmem>>, %arg3: memref<16x128xf32, #tpu.memory_space<vmem>>, %arg4: memref<1x2x128xf32, #tpu.memory_space<vmem>>, %arg5: memref<1x128xf32, #tpu.memory_space<vmem>>, %arg6: memref<1x128xf32, #tpu.memory_space<vmem>>) attributes {dimension_semantics = [#tpu.dimension_semantics<parallel>, #tpu.dimension_semantics<arbitrary>], iteration_bounds = array<i64: 1, 1>, scalar_prefetch = 0 : i64, scratch_operands = 2 : i64, tpu.core_type = #tpu.core_type<tc>, window_params = [{transform_indices = @transform_0, window_bounds = array<i64: 16, 128>}, {transform_indices = @transform_1, window_bounds = array<i64: 16, 128>}, {transform_indices = @transform_2, window_bounds = array<i64: 1, 2, 128>}]} {
    %c0_i32 = arith.constant 0 : i32
    %0 = arith.cmpi eq, %arg1, %c0_i32 : i32
    %1 = arith.extui %0 : i1 to i32
    %c0_i32_0 = arith.constant 0 : i32
    %2 = arith.cmpi ne, %1, %c0_i32_0 : i32
    scf.if %2 {
      %cst_15 = arith.constant 0.000000e+00 : f32
      %21 = vector.broadcast %cst_15 : f32 to vector<1x128xf32>
      %c0_16 = arith.constant 0 : index
      %c0_17 = arith.constant 0 : index
      %22 = vector.load %arg5[%c0_16, %c0_17] : memref<1x128xf32, #tpu.memory_space<vmem>>, vector<1x128xf32>
      tpu.vector_store %arg5[%c0_16, %c0_17], %21 {strides = array<i32>} : memref<1x128xf32, #tpu.memory_space<vmem>>, vector<1x128xf32>,
      %cst_18 = arith.constant 0.000000e+00 : f32
      %23 = vector.broadcast %cst_18 : f32 to vector<1x128xf32>
      %c0_19 = arith.constant 0 : index
      %c0_20 = arith.constant 0 : index
      %24 = vector.load %arg6[%c0_19, %c0_20] : memref<1x128xf32, #tpu.memory_space<vmem>>, vector<1x128xf32>
      tpu.vector_store %arg6[%c0_19, %c0_20], %23 {strides = array<i32>} : memref<1x128xf32, #tpu.memory_space<vmem>>, vector<1x128xf32>,
    } else {
    }
    %c0 = arith.constant 0 : index
    %c0_1 = arith.constant 0 : index
    %3 = vector.load %arg2[%c0, %c0_1] : memref<16x128xf32, #tpu.memory_space<vmem>>, vector<16x128xf32>
    %c0_2 = arith.constant 0 : index
    %c0_3 = arith.constant 0 : index
    %4 = vector.load %arg3[%c0_2, %c0_3] : memref<16x128xf32, #tpu.memory_space<vmem>>, vector<16x128xf32>
    %5 = arith.subf %3, %4 : vector<16x128xf32>
    %c0_4 = arith.constant 0 : index
    %c0_5 = arith.constant 0 : index
    %6 = vector.load %arg5[%c0_4, %c0_5] : memref<1x128xf32, #tpu.memory_space<vmem>>, vector<1x128xf32>
    %7 = arith.mulf %5, %5 : vector<16x128xf32>
    %cst = arith.constant dense<0.000000e+00> : vector<128xf32>
    %8 = vector.multi_reduction <add>, %7, %cst [0] : vector<16x128xf32> to vector<128xf32>
    %9 = vector.shape_cast %8 : vector<128xf32> to vector<1x128xf32>
    %10 = arith.addf %6, %9 : vector<1x128xf32>
    %c0_6 = arith.constant 0 : index
    %c0_7 = arith.constant 0 : index
    %11 = vector.load %arg5[%c0_6, %c0_7] : memref<1x128xf32, #tpu.memory_space<vmem>>, vector<1x128xf32>
    tpu.vector_store %arg5[%c0_6, %c0_7], %10 {strides = array<i32>} : memref<1x128xf32, #tpu.memory_space<vmem>>, vector<1x128xf32>,
    %c0_8 = arith.constant 0 : index
    %c0_9 = arith.constant 0 : index
    %12 = vector.load %arg6[%c0_8, %c0_9] : memref<1x128xf32, #tpu.memory_space<vmem>>, vector<1x128xf32>
    %13 = math.absf %5 : vector<16x128xf32>
    %cst_10 = arith.constant dense<0.000000e+00> : vector<128xf32>
    %14 = vector.multi_reduction <add>, %13, %cst_10 [0] : vector<16x128xf32> to vector<128xf32>
    %15 = vector.shape_cast %14 : vector<128xf32> to vector<1x128xf32>
    %16 = arith.addf %12, %15 : vector<1x128xf32>
    %c0_11 = arith.constant 0 : index
    %c0_12 = arith.constant 0 : index
    %17 = vector.load %arg6[%c0_11, %c0_12] : memref<1x128xf32, #tpu.memory_space<vmem>>, vector<1x128xf32>
    tpu.vector_store %arg6[%c0_11, %c0_12], %16 {strides = array<i32>} : memref<1x128xf32, #tpu.memory_space<vmem>>, vector<1x128xf32>,
    %c0_i32_13 = arith.constant 0 : i32
    %18 = arith.cmpi eq, %arg1, %c0_i32_13 : i32
    %19 = arith.extui %18 : i1 to i32
    %c0_i32_14 = arith.constant 0 : i32
    %20 = arith.cmpi ne, %19, %c0_i32_14 : i32
    scf.if %20 {
      %c0_15 = arith.constant 0 : index
      %c0_16 = arith.constant 0 : index
      %21 = vector.load %arg5[%c0_15, %c0_16] : memref<1x128xf32, #tpu.memory_space<vmem>>, vector<1x128xf32>
      %c0_17 = arith.constant 0 : index
      %c0_18 = arith.constant 0 : index
      %22 = vector.load %arg6[%c0_17, %c0_18] : memref<1x128xf32, #tpu.memory_space<vmem>>, vector<1x128xf32>
      %23 = tpu.concatenate %21, %22 in 0 : vector<1x128xf32>, vector<1x128xf32> -> vector<2x128xf32>
      %24 = vector.shape_cast %23 : vector<2x128xf32> to vector<1x2x128xf32>
      %c0_19 = arith.constant 0 : index
      %c0_20 = arith.constant 0 : index
      %c0_21 = arith.constant 0 : index
      %25 = vector.load %arg4[%c0_19, %c0_20, %c0_21] : memref<1x2x128xf32, #tpu.memory_space<vmem>>, vector<1x2x128xf32>
      tpu.vector_store %arg4[%c0_19, %c0_20, %c0_21], %24 {strides = array<i32>} : memref<1x2x128xf32, #tpu.memory_space<vmem>>, vector<1x2x128xf32>,
    } else {
    }
    return
  }
  func.func @transform_0(%arg0: i32, %arg1: i32) -> (i32, i32) {
    %c1_i32 = arith.constant 1 : i32
    %0 = arith.muli %arg0, %c1_i32 : i32
    %1 = arith.addi %0, %arg1 : i32
    %c0_i32 = arith.constant 0 : i32
    %c0_i32_0 = arith.constant 0 : i32
    return %1, %c0_i32 : i32, i32
  }
  func.func @transform_1(%arg0: i32, %arg1: i32) -> (i32, i32) {
    %c1_i32 = arith.constant 1 : i32
    %0 = arith.muli %arg0, %c1_i32 : i32
    %1 = arith.addi %0, %arg1 : i32
    %c0_i32 = arith.constant 0 : i32
    %c0_i32_0 = arith.constant 0 : i32
    return %1, %c0_i32 : i32, i32
  }
  func.func @transform_2(%arg0: i32, %arg1: i32) -> (i32, i32, i32) {
    %c0_i32 = arith.constant 0 : i32
    %c0_i32_0 = arith.constant 0 : i32
    %c0_i32_1 = arith.constant 0 : i32
    return %arg0, %c0_i32, %c0_i32_0 : i32, i32, i32
  }
}

</mosaic_0001>

<llo_original>
// kernel: tpu_custom_call.1
$region0: #{tpu_custom_call.1}
  #allocation0 [shape = 'u32[]', space=smem, size = 0x4, offset = 0x4, fixed_abs, tag = 'smem constant byte address 0x4 - core index']
  #allocation1 [shape = 'u32[144,128]{1,0:T(1,128)}', space=vmem, size = 0x12000, scoped, tag = 'internal scratch']
  #allocation2 [shape = 'f32[1,128]{1,0:T(1,128)}', space=vmem, size = 0x200, scoped, tag = 'scratch operand']
  #allocation3 [shape = 'f32[1,128]{1,0:T(1,128)}', space=vmem, size = 0x200, scoped, tag = 'scratch operand']
  %s0 = inlined_call_operand.hbm [shape: f32[16,128], index: 0, kind: input, shape index: {}]
  %s1 = inlined_call_operand.hbm [shape: f32[16,128], index: 1, kind: input, shape index: {}]
  %s2 = inlined_call_operand.hbm [shape: f32[1,2,128], index: 2, kind: output, shape index: {}]
  %s3 = sld [smem:[#allocation0]]
  $region34: #{tpu_custom_call.1} parent=0
    _
  %s5 = ssub.s32 1, %s3
  %s6 = scalar_select 0, %s5, %s3
  $region1: #{tpu_custom_call.1} parent=0
    #allocation4 [shape = 'u8[8192]{0}', space=vmem, size = 0x2000, scoped, tag = 'input window, operand 0, single buffered']
    #allocation5 [shape = 's32[1]{0}', space=sflag, size = 0x4, scoped, tag = 'scoped memory for tpu_custom_call.1']
    #allocation6 [shape = 's32[1]{0}', space=sflag, size = 0x4, scoped, tag = 'scoped memory for tpu_custom_call.1']
    #allocation7 [shape = 'u8[8192]{0}', space=vmem, size = 0x2000, scoped, tag = 'input window, operand 1, single buffered']
    #allocation8 [shape = 's32[1]{0}', space=sflag, size = 0x4, scoped, tag = 'scoped memory for tpu_custom_call.1']
    #allocation9 [shape = 'u8[1024]{0}', space=vmem, size = 0x400, scoped, tag = 'output window, operand 0, single buffered']
    %7 = vsyncpa [#allocation5], 0
    %8 = vsyncpa [#allocation8], 0
    %9 = vsyncpa [#allocation6], 0
    // Predicated region
    $region2: #{tpu_custom_call.1} parent=1 // pred_check
      _
    $region3: #{tpu_custom_call.1} parent=1 // pred_check_branch
      %11 = sbr.rel (0) target = $region5
    $region4: #{tpu_custom_call.1} parent=1 // pred_region
      %s12 = sadd.s32 0, 0
      %s13 = smul.u32 2, %s12
      %s15 = ssub.s32 256, 256
      %16 = vsyncadd [#allocation5], %s15
      %s17 = smul.addr %s13, 128
      %s18 = scalar_lea.hbm %s0, %s17
      %s19 = sshll.u32 [#allocation4], 4
      %s20 = int_to_ptr.vmem [resolvable:$true] %s19
      %25 = dma.hbm_to_vmem [thread:$0]  %s18, 256, %s20, [#allocation5], 128, 128, 8
    $region5: #{tpu_custom_call.1} parent=1 // pred_fallthru
      _
    // Predicated region
    $region6: #{tpu_custom_call.1} parent=1 // pred_check
      _
    $region7: #{tpu_custom_call.1} parent=1 // pred_check_branch
      %27 = sbr.rel (0) target = $region9
    $region8: #{tpu_custom_call.1} parent=1 // pred_region
      %s28 = sadd.s32 0, 0
      %s29 = smul.u32 2, %s28
      %s31 = ssub.s32 256, 256
      %32 = vsyncadd [#allocation8], %s31
      %s33 = smul.addr %s29, 128
      %s34 = scalar_lea.hbm %s1, %s33
      %s35 = sshll.u32 [#allocation7], 4
      %s36 = int_to_ptr.vmem [resolvable:$true] %s35
      %41 = dma.hbm_to_vmem [thread:$0]  %s34, 256, %s36, [#allocation8], 128, 128, 8
    $region9: #{tpu_custom_call.1} parent=1 // pred_fallthru
      _
    // Predicated region
    $region10: #{tpu_custom_call.1} parent=1 // pred_check
      _
    $region11: #{tpu_custom_call.1} parent=1 // pred_check_branch
      %43 = sbr.rel (0) target = $region13
    $region12: #{tpu_custom_call.1} parent=1 // pred_region
      %44 = dma.done [#allocation5], 256
    $region13: #{tpu_custom_call.1} parent=1 // pred_fallthru
      _
    // Predicated region
    $region14: #{tpu_custom_call.1} parent=1 // pred_check
      _
    $region15: #{tpu_custom_call.1} parent=1 // pred_check_branch
      %46 = sbr.rel (0) target = $region17
    $region16: #{tpu_custom_call.1} parent=1 // pred_region
      %47 = dma.done [#allocation8], 256
    $region17: #{tpu_custom_call.1} parent=1 // pred_fallthru
      _
    %s48 = sadd.s32 0, 0
    %s49 = smul.u32 2, %s48
    %s50 = sadd.s32 0, 0
    %s51 = smul.u32 2, %s50
    %p52 = scmp.eq.s32.totalorder 0, 0
    // Predicated region
    $region18: #{tpu_custom_call.1} parent=1 // pred_check
      %p53 = pneg %p52
    $region19: #{tpu_custom_call.1} parent=1 // pred_check_branch
      %55 = sbr.rel (%p53) target = $region21
    $region20: #{tpu_custom_call.1} parent=1 // pred_region
      %56 = vst [vmem:[#allocation2] sm:$0x1] 0.0
      %57 = vst [vmem:[#allocation3] sm:$0x1] 0.0
    $region21: #{tpu_custom_call.1} parent=1 // pred_fallthru
      _
    %v58 = vld [vmem:[#allocation4] sm:$0xff]
    %v59 = vld [vmem:[#allocation4 + $0x8] sm:$0xff]
    %v60 = vld [vmem:[#allocation7] sm:$0xff]
    %v61 = vld [vmem:[#allocation7 + $0x8] sm:$0xff]
    %v62 = vsub.f32 %v58, %v60
    %v63 = vsub.f32 %v59, %v61
    %v64 = vld [vmem:[#allocation2] sm:$0x1]
    %v65 = vmul.f32 %v62, %v62
    %v66 = vmul.f32 %v63, %v63
    %v67 = vadd.f32 %v65, %v66
    %v68 = vrot.slane %v67, 4
    %v69 = vadd.f32 %v67, %v68
    %v70 = vrot.slane %v69, 2
    %v71 = vadd.f32 %v69, %v70
    %v72 = vrot.slane %v71, 1
    %v73 = vadd.f32 %v71, %v72
    %v74 = vadd.f32 %v64, %v73
    %75 = vst [vmem:[#allocation2] sm:$0x1] %v74
    %v76 = vld [vmem:[#allocation3] sm:$0x1]
    %v77 = vand.u32 2147483647, %v62
    %v78 = vand.u32 2147483647, %v63
    %v79 = vadd.f32 %v77, %v78
    %v80 = vrot.slane %v79, 4
    %v81 = vadd.f32 %v79, %v80
    %v82 = vrot.slane %v81, 2
    %v83 = vadd.f32 %v81, %v82
    %v84 = vrot.slane %v83, 1
    %v85 = vadd.f32 %v83, %v84
    %v86 = vadd.f32 %v76, %v85
    %87 = vst [vmem:[#allocation3] sm:$0x1] %v86
    // Predicated region
    $region22: #{tpu_custom_call.1} parent=1 // pred_check
      %p88 = pneg %p52
    $region23: #{tpu_custom_call.1} parent=1 // pred_check_branch
      %90 = sbr.rel (%p88) target = $region25
    $region24: #{tpu_custom_call.1} parent=1 // pred_region
      %v91 = vld [vmem:[#allocation2] sm:$0x1]
      %v92 = vld [vmem:[#allocation3] sm:$0x1]
      %v94 = vlaneseq
      %v95 = vshrl.u32 %v94, 7
      %v96 = vsub.s32 0, %v95
      %v97 = vrot.slane %v92, %v96
      %vm99 = vcmask 1040384
      %v100 = vsel %vm99, %v91, %v97
      %101 = vst [vmem:[#allocation9] sm:$0x3] %v100
    $region25: #{tpu_custom_call.1} parent=1 // pred_fallthru
      _
    // Predicated region
    $region26: #{tpu_custom_call.1} parent=1 // pred_check
      _
    $region27: #{tpu_custom_call.1} parent=1 // pred_check_branch
      %103 = sbr.rel (0) target = $region29
    $region28: #{tpu_custom_call.1} parent=1 // pred_region
      %s105 = ssub.s32 32, 32
      %106 = vsyncadd [#allocation6], %s105
      %s108 = sshll.u32 [#allocation9], 4
      %s109 = int_to_ptr.vmem [resolvable:$true] %s108
      %111 = dma.vmem_to_hbm [thread:$0]  %s109, 32, %s2, [#allocation6]
    $region29: #{tpu_custom_call.1} parent=1 // pred_fallthru
      _
    // Predicated region
    $region30: #{tpu_custom_call.1} parent=1 // pred_check
      _
    $region31: #{tpu_custom_call.1} parent=1 // pred_check_branch
      %113 = sbr.rel (0) target = $region33
    $region32: #{tpu_custom_call.1} parent=1 // pred_region
      %114 = dma.done [#allocation6], 32
    $region33: #{tpu_custom_call.1} parent=1 // pred_fallthru
      _
    %115 = vsyncpa [#allocation5], 1
    %116 = vsyncpa [#allocation8], 1
    %117 = vsyncpa [#allocation6], 1

</llo_original>
